<compile_context>
chip_gen: v5e
topology: v5e:2x2
jax: 0.10.0
libtpu: 0.0.40
codegen_flags: <defaults>
</compile_context>

<pallas_src>
import functools

import jax
import jax.numpy as jnp
from jax.experimental import pallas as pl
from jax.experimental.pallas import tpu as pltpu

DILATIONS = (1, 3, 9)
BN_EPS = 1e-5


def _causal_block_kernel(x_ref, w_ref, g_ref, beta_ref, o_ref,
                         *, seq_len, kernel_size):
    N, C, L = x_ref.shape
    K = kernel_size
    NL = N * L

    # (N, C, L) -> (C, N*L): lane-tile-aligned concat done in VMEM (cheap),
    # replacing the old wrapper transpose (which was a full HBM round trip).
    x = jnp.concatenate([x_ref[n] for n in range(N)], axis=1)        # (C, NL)

    # Local time index inside each batch element (lanes hold flattened
    # (batch, time)).  Used to zero the causally-invalid wrapped part of each
    # roll, which also blocks cross-batch leakage.  Hoisted: reused 6 times.
    t_local = jax.lax.broadcasted_iota(jnp.int32, (C, NL), 1) % seq_len

    for u, d in enumerate(DILATIONS):
        # ---- dilated causal conv1d: all K taps fused into ONE MXU matmul ----
        # taps[j] = x shifted back in time by d*j (zeros where it would read
        # before t=0 of its batch element).
        taps = [x]
        for j in range(1, K):
            s = d * j
            rolled = pltpu.roll(x, shift=s, axis=1)                  # XLU
            taps.append(jnp.where(t_local >= s, rolled, 0.0))
        xs = jnp.concatenate(taps, axis=0)                           # (K*C, NL)
        acc = jnp.dot(w_ref[u], xs,                                  # (C, NL)
                      preferred_element_type=jnp.float32)
        # (conv bias intentionally omitted: exact no-op under training BN)

        # ---- BatchNorm (training stats) folded into scale/shift + ReLU ----
        mean = jnp.mean(acc, axis=1, keepdims=True)                  # (C, 1)
        centered = acc - mean
        var = jnp.mean(centered * centered, axis=1, keepdims=True)   # (C, 1)
        scale = g_ref[u] * jax.lax.rsqrt(var + BN_EPS)               # (C, 1)
        y = centered * scale + beta_ref[u]
        # ---- residual add ----
        x = x + jnp.maximum(y, 0.0)

    # (C, N*L) -> (N, C, L) writeback, again without any HBM transpose.
    for n in range(N):
        o_ref[n] = x[:, n * seq_len:(n + 1) * seq_len]


def causal_conv_block(x, weights, biases, gammas, betas, *, kernel_size):
    """x: (N, C, L) f32; weights[u]: (C, C, K); biases/gammas/betas[u]: (C,)."""
    N, C, L = x.shape
    K = kernel_size
    del biases  # provably a no-op under training-mode BatchNorm (mean cancels it)

    # Per-unit lane-dense weight (C_out, K*C_in): column block j multiplies the
    # input shifted back by dilation*j, i.e. conv tap K-1-j.
    w_stack = jnp.stack([
        jnp.concatenate([w[:, :, K - 1 - j] for j in range(K)], axis=1)
        for w in weights
    ]).astype(jnp.float32)                                           # (3, C, K*C)
    g_stack = jnp.stack(gammas).astype(jnp.float32)[:, :, None]      # (3, C, 1)
    beta_stack = jnp.stack(betas).astype(jnp.float32)[:, :, None]    # (3, C, 1)

    kernel = functools.partial(_causal_block_kernel, seq_len=L, kernel_size=K)
    vmem = pl.BlockSpec(memory_space=pltpu.MemorySpace.VMEM)
    # ~16 live (C, N*L) f32 slabs worst case + weights; clamp to a budget that
    # is valid on v5e (128 MiB phys), v6e (128 MiB) and v7x (64 MiB per TC).
    vmem_needed = 4 * (16 * N * C * L + 3 * K * C * C + 8 * L)
    compiler_params = pltpu.CompilerParams(
        vmem_limit_bytes=int(min(max(vmem_needed, 32 << 20), 64 << 20)))

    # TODO(synk): for long L / v7x, split into a two-pass BN (partial sums over
    # a parallel time-tile grid) to use both TensorCores and pipeline HBM.
    return pl.pallas_call(
        kernel,
        out_shape=jax.ShapeDtypeStruct((N, C, L), jnp.float32),
        in_specs=[vmem, vmem, vmem, vmem],
        out_specs=vmem,
        compiler_params=compiler_params,
    )(x.astype(jnp.float32), w_stack, g_stack, beta_stack)


def reference_forward(x, weights, biases, gammas, betas, *, kernel_size):
    """Pure-JAX reference matching PyTorch CausalConvBlock.forward (with bias)."""
    K = kernel_size
    for (w, b, g, bt), d in zip(zip(weights, biases, gammas, betas), DILATIONS):
        pad = d * (K - 1)
        y = jax.lax.conv_general_dilated(
            x, w, window_strides=(1,), padding=[(pad, 0)], rhs_dilation=(d,),
            dimension_numbers=("NCH", "OIH", "NCH"))
        y = y + b[None, :, None]
        mean = y.mean(axis=(0, 2), keepdims=True)
        var = ((y - mean) ** 2).mean(axis=(0, 2), keepdims=True)
        yhat = (y - mean) / jnp.sqrt(var + BN_EPS)
        y = g[None, :, None] * yhat + bt[None, :, None]
        x = x + jnp.maximum(y, 0.0)
    return x


if __name__ == "__main__":
    N, C, L, K = 2, 32, 128, 3      # batch, hidden_dim, seq_len, kernel_size

    key = jax.random.PRNGKey(0)
    keys = jax.random.split(key, 4)
    x = jax.random.normal(keys[0], (N, C, L), jnp.float32)

    # Deterministic parameter init (shapes follow nn.Conv1d / nn.BatchNorm1d).
    weights, biases, gammas, betas = [], [], [], []
    for u in range(3):
        wk, bk = jax.random.split(keys[u + 1])
        bound = 1.0 / float((C * K) ** 0.5)
        weights.append(jax.random.uniform(wk, (C, C, K), jnp.float32, -bound, bound))
        biases.append(jax.random.uniform(bk, (C,), jnp.float32, -bound, bound))
        gammas.append(jnp.ones((C,), jnp.float32))   # BatchNorm default init
        betas.append(jnp.zeros((C,), jnp.float32))

    out = causal_conv_block(x, weights, biases, gammas, betas, kernel_size=K)
    out = jax.block_until_ready(out)

    ref = reference_forward(x, weights, biases, gammas, betas, kernel_size=K)
    assert out.shape == (N, C, L) and out.dtype == jnp.float32
    assert jnp.allclose(out, ref, atol=1e-4, rtol=1e-4), (
        float(jnp.max(jnp.abs(out - ref))))

    # TODO(synk): realtime_forward (use_realtime=True streaming path) is not
    # implemented; only the standard forward() semantics are covered.
    print("KERNEL_OK")
</pallas_src>

<mosaic_0001>
module attributes {stable_mosaic.version = 11 : i64} {
  func.func @_causal_block_kernel(%arg0: memref<2x32x128xf32, #tpu.memory_space<vmem>>, %arg1: memref<3x32x96xf32, #tpu.memory_space<vmem>>, %arg2: memref<3x32x1xf32, #tpu.memory_space<vmem>>, %arg3: memref<3x32x1xf32, #tpu.memory_space<vmem>>, %arg4: memref<2x32x128xf32, #tpu.memory_space<vmem>>) attributes {dimension_semantics = [], scalar_prefetch = 0 : i64, scratch_operands = 0 : i64, tpu.core_type = #tpu.core_type<tc>} {
    %c0 = arith.constant 0 : index
    %c0_0 = arith.constant 0 : index
    %c0_1 = arith.constant 0 : index
    %0 = vector.load %arg0[%c0, %c0_0, %c0_1] : memref<2x32x128xf32, #tpu.memory_space<vmem>>, vector<1x32x128xf32>
    %1 = vector.shape_cast %0 : vector<1x32x128xf32> to vector<32x128xf32>
    %c1 = arith.constant 1 : index
    %c0_2 = arith.constant 0 : index
    %c0_3 = arith.constant 0 : index
    %2 = vector.load %arg0[%c1, %c0_2, %c0_3] : memref<2x32x128xf32, #tpu.memory_space<vmem>>, vector<1x32x128xf32>
    %3 = vector.shape_cast %2 : vector<1x32x128xf32> to vector<32x128xf32>
    %4 = tpu.concatenate %1, %3 in 1 : vector<32x128xf32>, vector<32x128xf32> -> vector<32x256xf32>
    %5 = tpu.iota {dimensions = array<i32: 1>} : vector<32x256xi32>
    %c128_i32 = arith.constant 128 : i32
    %c0_i32 = arith.constant 0 : i32
    %6 = arith.cmpi eq, %c128_i32, %c0_i32 : i32
    %c1_i32 = arith.constant 1 : i32
    %7 = arith.select %6, %c1_i32, %c128_i32 : i32
    %8 = vector.broadcast %7 : i32 to vector<32x256xi32>
    %9 = arith.remsi %5, %8 : vector<32x256xi32>
    %c0_i32_4 = arith.constant 0 : i32
    %10 = vector.broadcast %c0_i32_4 : i32 to vector<32x256xi32>
    %11 = arith.cmpi ne, %9, %10 : vector<32x256xi32>
    %c0_i32_5 = arith.constant 0 : i32
    %12 = vector.broadcast %c0_i32_5 : i32 to vector<32x256xi32>
    %13 = arith.cmpi slt, %9, %12 : vector<32x256xi32>
    %c0_i32_6 = arith.constant 0 : i32
    %14 = arith.cmpi slt, %7, %c0_i32_6 : i32
    %15 = vector.broadcast %14 : i1 to vector<32x256xi1>
    %16 = vector.broadcast %15 : vector<32x256xi1> to vector<32x256xi1>
    %17 = arith.xori %13, %16 : vector<32x256xi1>
    %18 = arith.andi %17, %11 : vector<32x256xi1>
    %19 = vector.broadcast %7 : i32 to vector<32x256xi32>
    %20 = arith.addi %9, %19 : vector<32x256xi32>
    %21 = arith.select %18, %20, %9 : vector<32x256xi1>, vector<32x256xi32>
    %c1_i32_7 = arith.constant 1 : i32
    %22 = tpu.dynamic_rotate %4 by %c1_i32_7 dim 1 : vector<32x256xf32>, i32 -> vector<32x256xf32>
    %c1_i32_8 = arith.constant 1 : i32
    %23 = vector.broadcast %c1_i32_8 : i32 to vector<32x256xi32>
    %24 = arith.cmpi sge, %21, %23 : vector<32x256xi32>
    %cst = arith.constant 0.000000e+00 : f32
    %25 = vector.broadcast %cst : f32 to vector<32x256xf32>
    %26 = arith.select %24, %22, %25 : vector<32x256xi1>, vector<32x256xf32>
    %c2_i32 = arith.constant 2 : i32
    %27 = tpu.dynamic_rotate %4 by %c2_i32 dim 1 : vector<32x256xf32>, i32 -> vector<32x256xf32>
    %c2_i32_9 = arith.constant 2 : i32
    %28 = vector.broadcast %c2_i32_9 : i32 to vector<32x256xi32>
    %29 = arith.cmpi sge, %21, %28 : vector<32x256xi32>
    %cst_10 = arith.constant 0.000000e+00 : f32
    %30 = vector.broadcast %cst_10 : f32 to vector<32x256xf32>
    %31 = arith.select %29, %27, %30 : vector<32x256xi1>, vector<32x256xf32>
    %32 = tpu.concatenate %4, %26, %31 in 0 : vector<32x256xf32>, vector<32x256xf32>, vector<32x256xf32> -> vector<96x256xf32>
    %c0_11 = arith.constant 0 : index
    %c0_12 = arith.constant 0 : index
    %c0_13 = arith.constant 0 : index
    %33 = vector.load %arg1[%c0_11, %c0_12, %c0_13] : memref<3x32x96xf32, #tpu.memory_space<vmem>>, vector<1x32x96xf32>
    %34 = vector.shape_cast %33 : vector<1x32x96xf32> to vector<32x96xf32>
    %cst_14 = arith.constant dense<0.000000e+00> : vector<32x256xf32>
    %35 = tpu.matmul %34, %32, %cst_14 {dimension_numbers = #tpu.dot_dimension_numbers<[1], [0], [0], [1], [0, 0, 1, 1], [], []>} : vector<32x96xf32>, vector<96x256xf32>, vector<32x256xf32> -> vector<32x256xf32>
    %cst_15 = arith.constant dense<0.000000e+00> : vector<32xf32>
    %36 = vector.multi_reduction <add>, %35, %cst_15 [1] : vector<32x256xf32> to vector<32xf32>
    %37 = vector.shape_cast %36 : vector<32xf32> to vector<32x1xf32>
    %cst_16 = arith.constant 2.560000e+02 : f32
    %38 = vector.broadcast %cst_16 : f32 to vector<32x1xf32>
    %39 = arith.divf %37, %38 : vector<32x1xf32>
    %40 = vector.broadcast %39 : vector<32x1xf32> to vector<32x256xf32>
    %41 = arith.subf %35, %40 : vector<32x256xf32>
    %42 = arith.mulf %41, %41 : vector<32x256xf32>
    %cst_17 = arith.constant dense<0.000000e+00> : vector<32xf32>
    %43 = vector.multi_reduction <add>, %42, %cst_17 [1] : vector<32x256xf32> to vector<32xf32>
    %44 = vector.shape_cast %43 : vector<32xf32> to vector<32x1xf32>
    %cst_18 = arith.constant 2.560000e+02 : f32
    %45 = vector.broadcast %cst_18 : f32 to vector<32x1xf32>
    %46 = arith.divf %44, %45 : vector<32x1xf32>
    %c0_19 = arith.constant 0 : index
    %c0_20 = arith.constant 0 : index
    %c0_21 = arith.constant 0 : index
    %47 = vector.load %arg2[%c0_19, %c0_20, %c0_21] : memref<3x32x1xf32, #tpu.memory_space<vmem>>, vector<1x32x1xf32>
    %48 = vector.shape_cast %47 : vector<1x32x1xf32> to vector<32x1xf32>
    %cst_22 = arith.constant 9.99999974E-6 : f32
    %49 = vector.broadcast %cst_22 : f32 to vector<32x1xf32>
    %50 = arith.addf %46, %49 : vector<32x1xf32>
    %51 = math.rsqrt %50 : vector<32x1xf32>
    %52 = arith.mulf %48, %51 : vector<32x1xf32>
    %53 = vector.broadcast %52 : vector<32x1xf32> to vector<32x256xf32>
    %54 = arith.mulf %41, %53 : vector<32x256xf32>
    %c0_23 = arith.constant 0 : index
    %c0_24 = arith.constant 0 : index
    %c0_25 = arith.constant 0 : index
    %55 = vector.load %arg3[%c0_23, %c0_24, %c0_25] : memref<3x32x1xf32, #tpu.memory_space<vmem>>, vector<1x32x1xf32>
    %56 = vector.shape_cast %55 : vector<1x32x1xf32> to vector<32x1xf32>
    %57 = vector.broadcast %56 : vector<32x1xf32> to vector<32x256xf32>
    %58 = arith.addf %54, %57 : vector<32x256xf32>
    %cst_26 = arith.constant 0.000000e+00 : f32
    %59 = vector.broadcast %cst_26 : f32 to vector<32x256xf32>
    %60 = arith.maximumf %58, %59 : vector<32x256xf32>
    %61 = arith.addf %4, %60 : vector<32x256xf32>
    %c3_i32 = arith.constant 3 : i32
    %62 = tpu.dynamic_rotate %61 by %c3_i32 dim 1 : vector<32x256xf32>, i32 -> vector<32x256xf32>
    %c3_i32_27 = arith.constant 3 : i32
    %63 = vector.broadcast %c3_i32_27 : i32 to vector<32x256xi32>
    %64 = arith.cmpi sge, %21, %63 : vector<32x256xi32>
    %cst_28 = arith.constant 0.000000e+00 : f32
    %65 = vector.broadcast %cst_28 : f32 to vector<32x256xf32>
    %66 = arith.select %64, %62, %65 : vector<32x256xi1>, vector<32x256xf32>
    %c6_i32 = arith.constant 6 : i32
    %67 = tpu.dynamic_rotate %61 by %c6_i32 dim 1 : vector<32x256xf32>, i32 -> vector<32x256xf32>
    %c6_i32_29 = arith.constant 6 : i32
    %68 = vector.broadcast %c6_i32_29 : i32 to vector<32x256xi32>
    %69 = arith.cmpi sge, %21, %68 : vector<32x256xi32>
    %cst_30 = arith.constant 0.000000e+00 : f32
    %70 = vector.broadcast %cst_30 : f32 to vector<32x256xf32>
    %71 = arith.select %69, %67, %70 : vector<32x256xi1>, vector<32x256xf32>
    %72 = tpu.concatenate %61, %66, %71 in 0 : vector<32x256xf32>, vector<32x256xf32>, vector<32x256xf32> -> vector<96x256xf32>
    %c1_31 = arith.constant 1 : index
    %c0_32 = arith.constant 0 : index
    %c0_33 = arith.constant 0 : index
    %73 = vector.load %arg1[%c1_31, %c0_32, %c0_33] : memref<3x32x96xf32, #tpu.memory_space<vmem>>, vector<1x32x96xf32>
    %74 = vector.shape_cast %73 : vector<1x32x96xf32> to vector<32x96xf32>
    %cst_34 = arith.constant dense<0.000000e+00> : vector<32x256xf32>
    %75 = tpu.matmul %74, %72, %cst_34 {dimension_numbers = #tpu.dot_dimension_numbers<[1], [0], [0], [1], [0, 0, 1, 1], [], []>} : vector<32x96xf32>, vector<96x256xf32>, vector<32x256xf32> -> vector<32x256xf32>
    %cst_35 = arith.constant dense<0.000000e+00> : vector<32xf32>
    %76 = vector.multi_reduction <add>, %75, %cst_35 [1] : vector<32x256xf32> to vector<32xf32>
    %77 = vector.shape_cast %76 : vector<32xf32> to vector<32x1xf32>
    %cst_36 = arith.constant 2.560000e+02 : f32
    %78 = vector.broadcast %cst_36 : f32 to vector<32x1xf32>
    %79 = arith.divf %77, %78 : vector<32x1xf32>
    %80 = vector.broadcast %79 : vector<32x1xf32> to vector<32x256xf32>
    %81 = arith.subf %75, %80 : vector<32x256xf32>
    %82 = arith.mulf %81, %81 : vector<32x256xf32>
    %cst_37 = arith.constant dense<0.000000e+00> : vector<32xf32>
    %83 = vector.multi_reduction <add>, %82, %cst_37 [1] : vector<32x256xf32> to vector<32xf32>
    %84 = vector.shape_cast %83 : vector<32xf32> to vector<32x1xf32>
    %cst_38 = arith.constant 2.560000e+02 : f32
    %85 = vector.broadcast %cst_38 : f32 to vector<32x1xf32>
    %86 = arith.divf %84, %85 : vector<32x1xf32>
    %c1_39 = arith.constant 1 : index
    %c0_40 = arith.constant 0 : index
    %c0_41 = arith.constant 0 : index
    %87 = vector.load %arg2[%c1_39, %c0_40, %c0_41] : memref<3x32x1xf32, #tpu.memory_space<vmem>>, vector<1x32x1xf32>
    %88 = vector.shape_cast %87 : vector<1x32x1xf32> to vector<32x1xf32>
    %cst_42 = arith.constant 9.99999974E-6 : f32
    %89 = vector.broadcast %cst_42 : f32 to vector<32x1xf32>
    %90 = arith.addf %86, %89 : vector<32x1xf32>
    %91 = math.rsqrt %90 : vector<32x1xf32>
    %92 = arith.mulf %88, %91 : vector<32x1xf32>
    %93 = vector.broadcast %92 : vector<32x1xf32> to vector<32x256xf32>
    %94 = arith.mulf %81, %93 : vector<32x256xf32>
    %c1_43 = arith.constant 1 : index
    %c0_44 = arith.constant 0 : index
    %c0_45 = arith.constant 0 : index
    %95 = vector.load %arg3[%c1_43, %c0_44, %c0_45] : memref<3x32x1xf32, #tpu.memory_space<vmem>>, vector<1x32x1xf32>
    %96 = vector.shape_cast %95 : vector<1x32x1xf32> to vector<32x1xf32>
    %97 = vector.broadcast %96 : vector<32x1xf32> to vector<32x256xf32>
    %98 = arith.addf %94, %97 : vector<32x256xf32>
    %cst_46 = arith.constant 0.000000e+00 : f32
    %99 = vector.broadcast %cst_46 : f32 to vector<32x256xf32>
    %100 = arith.maximumf %98, %99 : vector<32x256xf32>
    %101 = arith.addf %61, %100 : vector<32x256xf32>
    %c9_i32 = arith.constant 9 : i32
    %102 = tpu.dynamic_rotate %101 by %c9_i32 dim 1 : vector<32x256xf32>, i32 -> vector<32x256xf32>
    %c9_i32_47 = arith.constant 9 : i32
    %103 = vector.broadcast %c9_i32_47 : i32 to vector<32x256xi32>
    %104 = arith.cmpi sge, %21, %103 : vector<32x256xi32>
    %cst_48 = arith.constant 0.000000e+00 : f32
    %105 = vector.broadcast %cst_48 : f32 to vector<32x256xf32>
    %106 = arith.select %104, %102, %105 : vector<32x256xi1>, vector<32x256xf32>
    %c18_i32 = arith.constant 18 : i32
    %107 = tpu.dynamic_rotate %101 by %c18_i32 dim 1 : vector<32x256xf32>, i32 -> vector<32x256xf32>
    %c18_i32_49 = arith.constant 18 : i32
    %108 = vector.broadcast %c18_i32_49 : i32 to vector<32x256xi32>
    %109 = arith.cmpi sge, %21, %108 : vector<32x256xi32>
    %cst_50 = arith.constant 0.000000e+00 : f32
    %110 = vector.broadcast %cst_50 : f32 to vector<32x256xf32>
    %111 = arith.select %109, %107, %110 : vector<32x256xi1>, vector<32x256xf32>
    %112 = tpu.concatenate %101, %106, %111 in 0 : vector<32x256xf32>, vector<32x256xf32>, vector<32x256xf32> -> vector<96x256xf32>
    %c2 = arith.constant 2 : index
    %c0_51 = arith.constant 0 : index
    %c0_52 = arith.constant 0 : index
    %113 = vector.load %arg1[%c2, %c0_51, %c0_52] : memref<3x32x96xf32, #tpu.memory_space<vmem>>, vector<1x32x96xf32>
    %114 = vector.shape_cast %113 : vector<1x32x96xf32> to vector<32x96xf32>
    %cst_53 = arith.constant dense<0.000000e+00> : vector<32x256xf32>
    %115 = tpu.matmul %114, %112, %cst_53 {dimension_numbers = #tpu.dot_dimension_numbers<[1], [0], [0], [1], [0, 0, 1, 1], [], []>} : vector<32x96xf32>, vector<96x256xf32>, vector<32x256xf32> -> vector<32x256xf32>
    %cst_54 = arith.constant dense<0.000000e+00> : vector<32xf32>
    %116 = vector.multi_reduction <add>, %115, %cst_54 [1] : vector<32x256xf32> to vector<32xf32>
    %117 = vector.shape_cast %116 : vector<32xf32> to vector<32x1xf32>
    %cst_55 = arith.constant 2.560000e+02 : f32
    %118 = vector.broadcast %cst_55 : f32 to vector<32x1xf32>
    %119 = arith.divf %117, %118 : vector<32x1xf32>
    %120 = vector.broadcast %119 : vector<32x1xf32> to vector<32x256xf32>
    %121 = arith.subf %115, %120 : vector<32x256xf32>
    %122 = arith.mulf %121, %121 : vector<32x256xf32>
    %cst_56 = arith.constant dense<0.000000e+00> : vector<32xf32>
    %123 = vector.multi_reduction <add>, %122, %cst_56 [1] : vector<32x256xf32> to vector<32xf32>
    %124 = vector.shape_cast %123 : vector<32xf32> to vector<32x1xf32>
    %cst_57 = arith.constant 2.560000e+02 : f32
    %125 = vector.broadcast %cst_57 : f32 to vector<32x1xf32>
    %126 = arith.divf %124, %125 : vector<32x1xf32>
    %c2_58 = arith.constant 2 : index
    %c0_59 = arith.constant 0 : index
    %c0_60 = arith.constant 0 : index
    %127 = vector.load %arg2[%c2_58, %c0_59, %c0_60] : memref<3x32x1xf32, #tpu.memory_space<vmem>>, vector<1x32x1xf32>
    %128 = vector.shape_cast %127 : vector<1x32x1xf32> to vector<32x1xf32>
    %cst_61 = arith.constant 9.99999974E-6 : f32
    %129 = vector.broadcast %cst_61 : f32 to vector<32x1xf32>
    %130 = arith.addf %126, %129 : vector<32x1xf32>
    %131 = math.rsqrt %130 : vector<32x1xf32>
    %132 = arith.mulf %128, %131 : vector<32x1xf32>
    %133 = vector.broadcast %132 : vector<32x1xf32> to vector<32x256xf32>
    %134 = arith.mulf %121, %133 : vector<32x256xf32>
    %c2_62 = arith.constant 2 : index
    %c0_63 = arith.constant 0 : index
    %c0_64 = arith.constant 0 : index
    %135 = vector.load %arg3[%c2_62, %c0_63, %c0_64] : memref<3x32x1xf32, #tpu.memory_space<vmem>>, vector<1x32x1xf32>
    %136 = vector.shape_cast %135 : vector<1x32x1xf32> to vector<32x1xf32>
    %137 = vector.broadcast %136 : vector<32x1xf32> to vector<32x256xf32>
    %138 = arith.addf %134, %137 : vector<32x256xf32>
    %cst_65 = arith.constant 0.000000e+00 : f32
    %139 = vector.broadcast %cst_65 : f32 to vector<32x256xf32>
    %140 = arith.maximumf %138, %139 : vector<32x256xf32>
    %141 = arith.addf %101, %140 : vector<32x256xf32>
    %142 = vector.extract_strided_slice %141 {offsets = [0, 0], sizes = [32, 128], strides = [1, 1]} : vector<32x256xf32> to vector<32x128xf32>
    %c0_66 = arith.constant 0 : index
    %c0_67 = arith.constant 0 : index
    %c0_68 = arith.constant 0 : index
    %143 = vector.load %arg4[%c0_66, %c0_67, %c0_68] : memref<2x32x128xf32, #tpu.memory_space<vmem>>, vector<1x32x128xf32>
    %144 = vector.shape_cast %143 : vector<1x32x128xf32> to vector<32x128xf32>
    %145 = vector.shape_cast %142 : vector<32x128xf32> to vector<1x32x128xf32>
    tpu.vector_store %arg4[%c0_66, %c0_67, %c0_68], %145 {strides = array<i32>} : memref<2x32x128xf32, #tpu.memory_space<vmem>>, vector<1x32x128xf32>,
    %146 = vector.extract_strided_slice %141 {offsets = [0, 128], sizes = [32, 128], strides = [1, 1]} : vector<32x256xf32> to vector<32x128xf32>
    %c1_69 = arith.constant 1 : index
    %c0_70 = arith.constant 0 : index
    %c0_71 = arith.constant 0 : index
    %147 = vector.load %arg4[%c1_69, %c0_70, %c0_71] : memref<2x32x128xf32, #tpu.memory_space<vmem>>, vector<1x32x128xf32>
    %148 = vector.shape_cast %147 : vector<1x32x128xf32> to vector<32x128xf32>
    %149 = vector.shape_cast %146 : vector<32x128xf32> to vector<1x32x128xf32>
    tpu.vector_store %arg4[%c1_69, %c0_70, %c0_71], %149 {strides = array<i32>} : memref<2x32x128xf32, #tpu.memory_space<vmem>>, vector<1x32x128xf32>,
    return
  }
}

</mosaic_0001>

<llo_original>
// kernel: tpu_custom_call.1
$region0: #{tpu_custom_call.1}
  #allocation0 [shape = 'u32[]', space=smem, size = 0x4, offset = 0x4, fixed_abs, tag = 'smem constant byte address 0x4 - core index']
  #allocation1 [shape = 'u32[72,128]{1,0:T(1,128)}', space=vmem, size = 0x9000, scoped, tag = 'internal scratch']
  %s0 = inlined_call_operand.vmem [shape: f32[2,32,128], index: 0, kind: input, shape index: {}]
  %s1 = inlined_call_operand.vmem [shape: f32[3,32,96], index: 1, kind: input, shape index: {}]
  %s2 = inlined_call_operand.vmem [shape: f32[3,32,1], index: 2, kind: input, shape index: {}]
  %s3 = inlined_call_operand.vmem [shape: f32[3,32,1], index: 3, kind: input, shape index: {}]
  %s4 = inlined_call_operand.hbm [shape: f32[2,32,128], index: 4, kind: output, shape index: {}]
  %s5 = sld [smem:[#allocation0]]
  $region26: #{tpu_custom_call.1} parent=0
    _
  %s7 = ssub.s32 1, %s5
  %s8 = scalar_select 0, %s7, %s5
  $region1: #{tpu_custom_call.1} parent=0
    #allocation2 [shape = 'u8[32768]{0}', space=vmem, size = 0x8000, scoped, tag = 'output window, operand 0, single buffered']
    #allocation3 [shape = 's32[1]{0}', space=sflag, size = 0x4, scoped, tag = 'scoped memory for tpu_custom_call.1']
    %9 = vsyncpa [#allocation3], 0
    // Predicated region
    $region2: #{tpu_custom_call.1} parent=1 // pred_check
      _
    $region3: #{tpu_custom_call.1} parent=1 // pred_check_branch
      %11 = sbr.rel (0) target = $region5
    $region4: #{tpu_custom_call.1} parent=1 // pred_region
      _
    $region5: #{tpu_custom_call.1} parent=1 // pred_fallthru
      _
    // Predicated region
    $region6: #{tpu_custom_call.1} parent=1 // pred_check
      _
    $region7: #{tpu_custom_call.1} parent=1 // pred_check_branch
      %13 = sbr.rel (0) target = $region9
    $region8: #{tpu_custom_call.1} parent=1 // pred_region
      _
    $region9: #{tpu_custom_call.1} parent=1 // pred_fallthru
      _
    // Predicated region
    $region10: #{tpu_custom_call.1} parent=1 // pred_check
      _
    $region11: #{tpu_custom_call.1} parent=1 // pred_check_branch
      %15 = sbr.rel (0) target = $region13
    $region12: #{tpu_custom_call.1} parent=1 // pred_region
      _
    $region13: #{tpu_custom_call.1} parent=1 // pred_fallthru
      _
    // Predicated region
    $region14: #{tpu_custom_call.1} parent=1 // pred_check
      _
    $region15: #{tpu_custom_call.1} parent=1 // pred_check_branch
      %17 = sbr.rel (0) target = $region17
    $region16: #{tpu_custom_call.1} parent=1 // pred_region
      _
    $region17: #{tpu_custom_call.1} parent=1 // pred_fallthru
      _
    %v18 = vld [vmem:[%s0] sm:$0xff]
    %v19 = vld [vmem:[%s0 + $0x8] sm:$0xff]
    %v20 = vld [vmem:[%s0 + $0x10] sm:$0xff]
    %v21 = vld [vmem:[%s0 + $0x18] sm:$0xff]
    %s22 = scalar_lea.vmem %s0, 32
    %v23 = vld [vmem:[%s22] sm:$0xff]
    %v24 = vld [vmem:[%s22 + $0x8] sm:$0xff]
    %v25 = vld [vmem:[%s22 + $0x10] sm:$0xff]
    %v26 = vld [vmem:[%s22 + $0x18] sm:$0xff]
    %v27 = vlaneseq
    %v28 = vand.u32 %v27, 127
    %v29 = vadd.s32 %v28, 128
    %vm30 = vcmp.lt.s32.totalorder %v28, 0
    %v31 = vsub.s32 0, %v28
    %v32 = vsel %vm30, %v31, %v28
    %v33 = vshrl.u32 %v32, 7
    %v34 = vand.u32 %v32, 127
    %v35 = vsub.s32 0, %v34
    %v36 = vsel %vm30, %v35, %v34
    %vm37 = vcmp.lt.s32.totalorder %v29, 0
    %v38 = vsub.s32 0, %v29
    %v39 = vsel %vm37, %v38, %v29
    %v40 = vshrl.u32 %v39, 7
    %v41 = vand.u32 %v39, 127
    %v42 = vsub.s32 0, %v41
    %v43 = vsel %vm37, %v42, %v41
    %vm44 = vcmp.ne.s32.totalorder %v36, 0
    %vm45 = vcmp.ne.s32.totalorder %v43, 0
    %vm46 = vcmp.lt.s32.totalorder %v36, 0
    %vm47 = vcmp.lt.s32.totalorder %v43, 0
    %vm48 = vmand %vm46, %vm44
    %vm49 = vmand %vm47, %vm45
    %v50 = vadd.s32 %v36, 128
    %v51 = vadd.s32 %v43, 128
    %v52 = vsel %vm48, %v50, %v36
    %v53 = vsel %vm49, %v51, %v43
    %54 = vrot.lane.b32.xlu0 %v18, 1
    %v55 = vpop.permute.xlu0 %54
    %56 = vrot.lane.b32.xlu0 %v19, 1
    %v57 = vpop.permute.xlu0 %56
    %58 = vrot.lane.b32.xlu0 %v20, 1
    %v59 = vpop.permute.xlu0 %58
    %60 = vrot.lane.b32.xlu0 %v21, 1
    %v61 = vpop.permute.xlu0 %60
    %62 = vrot.lane.b32.xlu0 %v23, 1
    %v63 = vpop.permute.xlu0 %62
    %64 = vrot.lane.b32.xlu0 %v24, 1
    %v65 = vpop.permute.xlu0 %64
    %66 = vrot.lane.b32.xlu0 %v25, 1
    %v67 = vpop.permute.xlu0 %66
    %68 = vrot.lane.b32.xlu0 %v26, 1
    %v69 = vpop.permute.xlu0 %68
    %vm70 = vcmp.lt.s32.totalorder %v28, 1
    %v71 = vsel %vm70, %v55, %v63
    %v72 = vsel %vm70, %v57, %v65
    %v73 = vsel %vm70, %v59, %v67
    %v74 = vsel %vm70, %v61, %v69
    %v75 = vsel %vm70, %v63, %v55
    %v76 = vsel %vm70, %v65, %v57
    %v77 = vsel %vm70, %v67, %v59
    %v78 = vsel %vm70, %v69, %v61
    %vm79 = vcmp.ge.s32.totalorder %v52, 1
    %vm80 = vcmp.ge.s32.totalorder %v53, 1
    %v81 = vsel %vm79, %v75, 0.0
    %v82 = vsel %vm80, %v71, 0.0
    %v83 = vsel %vm79, %v76, 0.0
    %v84 = vsel %vm80, %v72, 0.0
    %v85 = vsel %vm79, %v77, 0.0
    %v86 = vsel %vm80, %v73, 0.0
    %v87 = vsel %vm79, %v78, 0.0
    %v88 = vsel %vm80, %v74, 0.0
    %89 = vrot.lane.b32.xlu0 %v18, 2
    %v90 = vpop.permute.xlu0 %89
    %91 = vrot.lane.b32.xlu0 %v19, 2
    %v92 = vpop.permute.xlu0 %91
    %93 = vrot.lane.b32.xlu0 %v20, 2
    %v94 = vpop.permute.xlu0 %93
    %95 = vrot.lane.b32.xlu0 %v21, 2
    %v96 = vpop.permute.xlu0 %95
    %97 = vrot.lane.b32.xlu0 %v23, 2
    %v98 = vpop.permute.xlu0 %97
    %99 = vrot.lane.b32.xlu0 %v24, 2
    %v100 = vpop.permute.xlu0 %99
    %101 = vrot.lane.b32.xlu0 %v25, 2
    %v102 = vpop.permute.xlu0 %101
    %103 = vrot.lane.b32.xlu0 %v26, 2
    %v104 = vpop.permute.xlu0 %103
    %vm105 = vcmp.lt.s32.totalorder %v28, 2
    %v106 = vsel %vm105, %v90, %v98
    %v107 = vsel %vm105, %v92, %v100
    %v108 = vsel %vm105, %v94, %v102
    %v109 = vsel %vm105, %v96, %v104
    %v110 = vsel %vm105, %v98, %v90
    %v111 = vsel %vm105, %v100, %v92
    %v112 = vsel %vm105, %v102, %v94
    %v113 = vsel %vm105, %v104, %v96
    %vm114 = vcmp.ge.s32.totalorder %v52, 2
    %vm115 = vcmp.ge.s32.totalorder %v53, 2
    %v116 = vsel %vm114, %v110, 0.0
    %v117 = vsel %vm115, %v106, 0.0
    %v118 = vsel %vm114, %v111, 0.0
    %v119 = vsel %vm115, %v107, 0.0
    %v120 = vsel %vm114, %v112, 0.0
    %v121 = vsel %vm115, %v108, 0.0
    %v122 = vsel %vm114, %v113, 0.0
    %v123 = vsel %vm115, %v109, 0.0
    %v124 = vld [vmem:[%s1] sm:$0xff]
    %v125 = vld [vmem:[%s1 + $0x8] sm:$0xff]
    %v126 = vld [vmem:[%s1 + $0x10] sm:$0xff]
    %v127 = vld [vmem:[%s1 + $0x18] sm:$0xff]
    %vm128 = vcmask 785408
    %v130 = vsel %vm128, %v124, 0
    %v133 = vsel %vm128, %v125, 0
    %v136 = vsel %vm128, %v126, 0
    %v139 = vsel %vm128, %v127, 0
    %141 = vmatpush.msra.mxu0 0.0
    %142 = vmatpush.msra.mxu0 0.0
    %143 = vmatpush.msra.mxu0 0.0
    %144 = vmatpush.msra.mxu0 0.0
    %145 = vmatpush.msra.mxu0 %v122
    %146 = vmatpush.msra.mxu0 %v120
    %147 = vmatpush.msra.mxu0 %v118
    %148 = vmatpush.msra.mxu0 %v116
    %149 = vmatpush.msra.mxu0 %v87
    %150 = vmatpush.msra.mxu0 %v85
    %151 = vmatpush.msra.mxu0 %v83
    %152 = vmatpush.msra.mxu0 %v81
    %153 = vmatpush.msra.mxu0 %v21
    %154 = vmatpush.msra.mxu0 %v20
    %155 = vmatpush.msra.mxu0 %v19
    %156 = vmatpush.msra.mxu0 %v18
    %157 = vmatmul.f32.gmra.mxu0 %v130
    %v158 = vpop.f32.mrf.mxu0
    %v159 = vadd.f32 0.0, %v158
    %160 = vmatmul.f32.gmra.mxu0 %v133
    %v161 = vpop.f32.mrf.mxu0
    %v162 = vadd.f32 0.0, %v161
    %163 = vmatmul.f32.gmra.mxu0 %v136
    %v164 = vpop.f32.mrf.mxu0
    %v165 = vadd.f32 0.0, %v164
    %166 = vmatmul.f32.gmra.mxu0 %v139
    %v167 = vpop.f32.mrf.mxu0
    %v168 = vadd.f32 0.0, %v167
    %169 = vdwg.mxu0
    %170 = vmatpush.msra.mxu0 0.0
    %171 = vmatpush.msra.mxu0 0.0
    %172 = vmatpush.msra.mxu0 0.0
    %173 = vmatpush.msra.mxu0 0.0
    %174 = vmatpush.msra.mxu0 %v123
    %175 = vmatpush.msra.mxu0 %v121
    %176 = vmatpush.msra.mxu0 %v119
    %177 = vmatpush.msra.mxu0 %v117
    %178 = vmatpush.msra.mxu0 %v88
    %179 = vmatpush.msra.mxu0 %v86
    %180 = vmatpush.msra.mxu0 %v84
    %181 = vmatpush.msra.mxu0 %v82
    %182 = vmatpush.msra.mxu0 %v26
    %183 = vmatpush.msra.mxu0 %v25
    %184 = vmatpush.msra.mxu0 %v24
    %185 = vmatpush.msra.mxu0 %v23
    %186 = vmatmul.f32.gmra.mxu0 %v130
    %v187 = vpop.f32.mrf.mxu0
    %v188 = vadd.f32 0.0, %v187
    %189 = vmatmul.f32.gmra.mxu0 %v133
    %v190 = vpop.f32.mrf.mxu0
    %v191 = vadd.f32 0.0, %v190
    %192 = vmatmul.f32.gmra.mxu0 %v136
    %v193 = vpop.f32.mrf.mxu0
    %v194 = vadd.f32 0.0, %v193
    %195 = vmatmul.f32.gmra.mxu0 %v139
    %v196 = vpop.f32.mrf.mxu0
    %v197 = vadd.f32 0.0, %v196
    %198 = vdwg.mxu0
    %v199 = vadd.f32 %v159, %v188
    %200 = vadd.xlane.f32.xlu0 %v199
    %v201 = vpop.xlane.xlu0 %200
    %v202 = vadd.f32 %v162, %v191
    %203 = vadd.xlane.f32.xlu0 %v202
    %v204 = vpop.xlane.xlu0 %203
    %v205 = vadd.f32 %v165, %v194
    %206 = vadd.xlane.f32.xlu0 %v205
    %v207 = vpop.xlane.xlu0 %206
    %v208 = vadd.f32 %v168, %v197
    %209 = vadd.xlane.f32.xlu0 %v208
    %v210 = vpop.xlane.xlu0 %209
    %v211 = vrcp.pop 256.0
    %v212 = vmul.f32 256.0, %v211
    %v213 = vsub.f32 1.0, %v212
    %v214 = vmul.f32 %v211, %v213
    %v215 = vadd.f32 %v211, %v214
    %vm216 = vweird.f32 %v211
    %v217 = vsel %vm216, %v211, %v215
    %v218 = vmul.f32 %v201, %v217
    %v219 = vmul.f32 %v204, %v217
    %v220 = vmul.f32 %v207, %v217
    %v221 = vmul.f32 %v210, %v217
    %v222 = vsub.f32 %v159, %v218
    %v223 = vsub.f32 %v188, %v218
    %v224 = vsub.f32 %v162, %v219
    %v225 = vsub.f32 %v191, %v219
    %v226 = vsub.f32 %v165, %v220
    %v227 = vsub.f32 %v194, %v220
    %v228 = vsub.f32 %v168, %v221
    %v229 = vsub.f32 %v197, %v221
    %v230 = vmul.f32 %v222, %v222
    %v231 = vmul.f32 %v223, %v223
    %v232 = vmul.f32 %v224, %v224
    %v233 = vmul.f32 %v225, %v225
    %v234 = vmul.f32 %v226, %v226
    %v235 = vmul.f32 %v227, %v227
    %v236 = vmul.f32 %v228, %v228
    %v237 = vmul.f32 %v229, %v229
    %v238 = vadd.f32 %v230, %v231
    %239 = vadd.xlane.f32.xlu0 %v238
    %v240 = vpop.xlane.xlu0 %239
    %v241 = vadd.f32 %v232, %v233
    %242 = vadd.xlane.f32.xlu0 %v241
    %v243 = vpop.xlane.xlu0 %242
    %v244 = vadd.f32 %v234, %v235
    %245 = vadd.xlane.f32.xlu0 %v244
    %v246 = vpop.xlane.xlu0 %245
    %v247 = vadd.f32 %v236, %v237
    %248 = vadd.xlane.f32.xlu0 %v247
    %v249 = vpop.xlane.xlu0 %248
    %v250 = vmul.f32 %v240, %v217
    %v251 = vmul.f32 %v243, %v217
    %v252 = vmul.f32 %v246, %v217
    %v253 = vmul.f32 %v249, %v217
    %v254 = vld [vmem:[%s2] sm:$0xff]
    %v255 = vld [vmem:[%s2 + $0x8] sm:$0xff]
    %v256 = vld [vmem:[%s2 + $0x10] sm:$0xff]
    %v257 = vld [vmem:[%s2 + $0x18] sm:$0xff]
    %v258 = vadd.f32 %v250, 1e-05
    %v259 = vadd.f32 %v251, 1e-05
    %v260 = vadd.f32 %v252, 1e-05
    %v261 = vadd.f32 %v253, 1e-05
    %v262 = vrsqrt.pop %v258
    %v263 = vmul.f32 %v262, %v258
    %v264 = vmul.f32 %v263, %v262
    %v265 = vmul.f32 0.5, %v264
    %v266 = vsub.f32 1.5, %v265
    %v267 = vmul.f32 %v262, %v266
    %vm268 = vweird.f32 %v258
    %vm269 = vweird.f32 %v262
    %vm270 = vmor %vm268, %vm269
    %v271 = vsel %vm270, %v262, %v267
    %v272 = vrsqrt.pop %v259
    %v273 = vmul.f32 %v272, %v259
    %v274 = vmul.f32 %v273, %v272
    %v275 = vmul.f32 0.5, %v274
    %v276 = vsub.f32 1.5, %v275
    %v277 = vmul.f32 %v272, %v276
    %vm278 = vweird.f32 %v259
    %vm279 = vweird.f32 %v272
    %vm280 = vmor %vm278, %vm279
    %v281 = vsel %vm280, %v272, %v277
    %v282 = vrsqrt.pop %v260
    %v283 = vmul.f32 %v282, %v260
    %v284 = vmul.f32 %v283, %v282
    %v285 = vmul.f32 0.5, %v284
    %v286 = vsub.f32 1.5, %v285
    %v287 = vmul.f32 %v282, %v286
    %vm288 = vweird.f32 %v260
    %vm289 = vweird.f32 %v282
    %vm290 = vmor %vm288, %vm289
    %v291 = vsel %vm290, %v282, %v287
    %v292 = vrsqrt.pop %v261
    %v293 = vmul.f32 %v292, %v261
    %v294 = vmul.f32 %v293, %v292
    %v295 = vmul.f32 0.5, %v294
    %v296 = vsub.f32 1.5, %v295
    %v297 = vmul.f32 %v292, %v296
    %vm298 = vweird.f32 %v261
    %vm299 = vweird.f32 %v292
    %vm300 = vmor %vm298, %vm299
    %v301 = vsel %vm300, %v292, %v297
    %v302 = vmul.f32 %v254, %v271
    %v303 = vmul.f32 %v255, %v281
    %v304 = vmul.f32 %v256, %v291
    %v305 = vmul.f32 %v257, %v301
    %307 = vset.pattern.permute.xlu0 0
    %308 = vperm.xlu0 %307, %v302
    %v309 = vpop.permute.xlu0 %308
    %312 = vset.pattern.permute.xlu0 0
    %313 = vperm.xlu0 %312, %v303
    %v314 = vpop.permute.xlu0 %313
    %317 = vset.pattern.permute.xlu0 0
    %318 = vperm.xlu0 %317, %v304
    %v319 = vpop.permute.xlu0 %318
    %322 = vset.pattern.permute.xlu0 0
    %323 = vperm.xlu0 %322, %v305
    %v324 = vpop.permute.xlu0 %323
    %v326 = vmul.f32 %v222, %v309
    %v327 = vmul.f32 %v223, %v309
    %v328 = vmul.f32 %v224, %v314
    %v329 = vmul.f32 %v225, %v314
    %v330 = vmul.f32 %v226, %v319
    %v331 = vmul.f32 %v227, %v319
    %v332 = vmul.f32 %v228, %v324
    %v333 = vmul.f32 %v229, %v324
    %v334 = vld [vmem:[%s3] sm:$0xff]
    %v335 = vld [vmem:[%s3 + $0x8] sm:$0xff]
    %v336 = vld [vmem:[%s3 + $0x10] sm:$0xff]
    %v337 = vld [vmem:[%s3 + $0x18] sm:$0xff]
    %339 = vset.pattern.permute.xlu0 0
    %340 = vperm.xlu0 %339, %v334
    %v341 = vpop.permute.xlu0 %340
    %344 = vset.pattern.permute.xlu0 0
    %345 = vperm.xlu0 %344, %v335
    %v346 = vpop.permute.xlu0 %345
    %349 = vset.pattern.permute.xlu0 0
    %350 = vperm.xlu0 %349, %v336
    %v351 = vpop.permute.xlu0 %350
    %354 = vset.pattern.permute.xlu0 0
    %355 = vperm.xlu0 %354, %v337
    %v356 = vpop.permute.xlu0 %355
    %v358 = vadd.f32 %v326, %v341
    %v359 = vadd.f32 %v327, %v341
    %v360 = vadd.f32 %v328, %v346
    %v361 = vadd.f32 %v329, %v346
    %v362 = vadd.f32 %v330, %v351
    %v363 = vadd.f32 %v331, %v351
    %v364 = vadd.f32 %v332, %v356
    %v365 = vadd.f32 %v333, %v356
    %v366 = vmax.f32 %v358, 0.0
    %v367 = vmax.f32 %v359, 0.0
    %v368 = vmax.f32 %v360, 0.0
    %v369 = vmax.f32 %v361, 0.0
    %v370 = vmax.f32 %v362, 0.0
    %v371 = vmax.f32 %v363, 0.0
    %v372 = vmax.f32 %v364, 0.0
    %v373 = vmax.f32 %v365, 0.0
    %v374 = vadd.f32 %v18, %v366
    %v375 = vadd.f32 %v23, %v367
    %v376 = vadd.f32 %v19, %v368
    %v377 = vadd.f32 %v24, %v369
    %v378 = vadd.f32 %v20, %v370
    %v379 = vadd.f32 %v25, %v371
    %v380 = vadd.f32 %v21, %v372
    %v381 = vadd.f32 %v26, %v373
    %382 = vrot.lane.b32.xlu0 %v374, 3
    %v383 = vpop.permute.xlu0 %382
    %384 = vrot.lane.b32.xlu0 %v376, 3
    %v385 = vpop.permute.xlu0 %384
    %386 = vrot.lane.b32.xlu0 %v378, 3
    %v387 = vpop.permute.xlu0 %386
    %388 = vrot.lane.b32.xlu0 %v380, 3
    %v389 = vpop.permute.xlu0 %388
    %390 = vrot.lane.b32.xlu0 %v375, 3
    %v391 = vpop.permute.xlu0 %390
    %392 = vrot.lane.b32.xlu0 %v377, 3
    %v393 = vpop.permute.xlu0 %392
    %394 = vrot.lane.b32.xlu0 %v379, 3
    %v395 = vpop.permute.xlu0 %394
    %396 = vrot.lane.b32.xlu0 %v381, 3
    %v397 = vpop.permute.xlu0 %396
    %vm398 = vcmp.lt.s32.totalorder %v28, 3
    %v399 = vsel %vm398, %v383, %v391
    %v400 = vsel %vm398, %v385, %v393
    %v401 = vsel %vm398, %v387, %v395
    %v402 = vsel %vm398, %v389, %v397
    %v403 = vsel %vm398, %v391, %v383
    %v404 = vsel %vm398, %v393, %v385
    %v405 = vsel %vm398, %v395, %v387
    %v406 = vsel %vm398, %v397, %v389
    %vm407 = vcmp.ge.s32.totalorder %v52, 3
    %vm408 = vcmp.ge.s32.totalorder %v53, 3
    %v409 = vsel %vm407, %v403, 0.0
    %v410 = vsel %vm408, %v399, 0.0
    %v411 = vsel %vm407, %v404, 0.0
    %v412 = vsel %vm408, %v400, 0.0
    %v413 = vsel %vm407, %v405, 0.0
    %v414 = vsel %vm408, %v401, 0.0
    %v415 = vsel %vm407, %v406, 0.0
    %v416 = vsel %vm408, %v402, 0.0
    %417 = vrot.lane.b32.xlu0 %v374, 6
    %v418 = vpop.permute.xlu0 %417
    %419 = vrot.lane.b32.xlu0 %v376, 6
    %v420 = vpop.permute.xlu0 %419
    %421 = vrot.lane.b32.xlu0 %v378, 6
    %v422 = vpop.permute.xlu0 %421
    %423 = vrot.lane.b32.xlu0 %v380, 6
    %v424 = vpop.permute.xlu0 %423
    %425 = vrot.lane.b32.xlu0 %v375, 6
    %v426 = vpop.permute.xlu0 %425
    %427 = vrot.lane.b32.xlu0 %v377, 6
    %v428 = vpop.permute.xlu0 %427
    %429 = vrot.lane.b32.xlu0 %v379, 6
    %v430 = vpop.permute.xlu0 %429
    %431 = vrot.lane.b32.xlu0 %v381, 6
    %v432 = vpop.permute.xlu0 %431
    %vm433 = vcmp.lt.s32.totalorder %v28, 6
    %v434 = vsel %vm433, %v418, %v426
    %v435 = vsel %vm433, %v420, %v428
    %v436 = vsel %vm433, %v422, %v430
    %v437 = vsel %vm433, %v424, %v432
    %v438 = vsel %vm433, %v426, %v418
    %v439 = vsel %vm433, %v428, %v420
    %v440 = vsel %vm433, %v430, %v422
    %v441 = vsel %vm433, %v432, %v424
    %vm442 = vcmp.ge.s32.totalorder %v52, 6
    %vm443 = vcmp.ge.s32.totalorder %v53, 6
    %v444 = vsel %vm442, %v438, 0.0
    %v445 = vsel %vm443, %v434, 0.0
    %v446 = vsel %vm442, %v439, 0.0
    %v447 = vsel %vm443, %v435, 0.0
    %v448 = vsel %vm442, %v440, 0.0
    %v449 = vsel %vm443, %v436, 0.0
    %v450 = vsel %vm442, %v441, 0.0
    %v451 = vsel %vm443, %v437, 0.0
    %s452 = scalar_lea.vmem %s1, 32
    %v453 = vld [vmem:[%s452] sm:$0xff]
    %v454 = vld [vmem:[%s452 + $0x8] sm:$0xff]
    %v455 = vld [vmem:[%s452 + $0x10] sm:$0xff]
    %v456 = vld [vmem:[%s452 + $0x18] sm:$0xff]
    %v458 = vsel %vm128, %v453, 0
    %v461 = vsel %vm128, %v454, 0
    %v464 = vsel %vm128, %v455, 0
    %v467 = vsel %vm128, %v456, 0
    %469 = vmatpush.msra.mxu0 0.0
    %470 = vmatpush.msra.mxu0 0.0
    %471 = vmatpush.msra.mxu0 0.0
    %472 = vmatpush.msra.mxu0 0.0
    %473 = vmatpush.msra.mxu0 %v450
    %474 = vmatpush.msra.mxu0 %v448
    %475 = vmatpush.msra.mxu0 %v446
    %476 = vmatpush.msra.mxu0 %v444
    %477 = vmatpush.msra.mxu0 %v415
    %478 = vmatpush.msra.mxu0 %v413
    %479 = vmatpush.msra.mxu0 %v411
    %480 = vmatpush.msra.mxu0 %v409
    %481 = vmatpush.msra.mxu0 %v380
    %482 = vmatpush.msra.mxu0 %v378
    %483 = vmatpush.msra.mxu0 %v376
    %484 = vmatpush.msra.mxu0 %v374
    %485 = vmatmul.f32.gmra.mxu0 %v458
    %v486 = vpop.f32.mrf.mxu0
    %v487 = vadd.f32 0.0, %v486
    %488 = vmatmul.f32.gmra.mxu0 %v461
    %v489 = vpop.f32.mrf.mxu0
    %v490 = vadd.f32 0.0, %v489
    %491 = vmatmul.f32.gmra.mxu0 %v464
    %v492 = vpop.f32.mrf.mxu0
    %v493 = vadd.f32 0.0, %v492
    %494 = vmatmul.f32.gmra.mxu0 %v467
    %v495 = vpop.f32.mrf.mxu0
    %v496 = vadd.f32 0.0, %v495
    %497 = vdwg.mxu0
    %498 = vmatpush.msra.mxu0 0.0
    %499 = vmatpush.msra.mxu0 0.0
    %500 = vmatpush.msra.mxu0 0.0
    %501 = vmatpush.msra.mxu0 0.0
    %502 = vmatpush.msra.mxu0 %v451
    %503 = vmatpush.msra.mxu0 %v449
    %504 = vmatpush.msra.mxu0 %v447
    %505 = vmatpush.msra.mxu0 %v445
    %506 = vmatpush.msra.mxu0 %v416
    %507 = vmatpush.msra.mxu0 %v414
    %508 = vmatpush.msra.mxu0 %v412
    %509 = vmatpush.msra.mxu0 %v410
    %510 = vmatpush.msra.mxu0 %v381
    %511 = vmatpush.msra.mxu0 %v379
    %512 = vmatpush.msra.mxu0 %v377
    %513 = vmatpush.msra.mxu0 %v375
    %514 = vmatmul.f32.gmra.mxu0 %v458
    %v515 = vpop.f32.mrf.mxu0
    %v516 = vadd.f32 0.0, %v515
    %517 = vmatmul.f32.gmra.mxu0 %v461
    %v518 = vpop.f32.mrf.mxu0
    %v519 = vadd.f32 0.0, %v518
    %520 = vmatmul.f32.gmra.mxu0 %v464
    %v521 = vpop.f32.mrf.mxu0
    %v522 = vadd.f32 0.0, %v521
    %523 = vmatmul.f32.gmra.mxu0 %v467
    %v524 = vpop.f32.mrf.mxu0
    %v525 = vadd.f32 0.0, %v524
    %526 = vdwg.mxu0
    %v527 = vadd.f32 %v487, %v516
    %528 = vadd.xlane.f32.xlu0 %v527
    %v529 = vpop.xlane.xlu0 %528
    %v530 = vadd.f32 %v490, %v519
    %531 = vadd.xlane.f32.xlu0 %v530
    %v532 = vpop.xlane.xlu0 %531
    %v533 = vadd.f32 %v493, %v522
    %534 = vadd.xlane.f32.xlu0 %v533
    %v535 = vpop.xlane.xlu0 %534
    %v536 = vadd.f32 %v496, %v525
    %537 = vadd.xlane.f32.xlu0 %v536
    %v538 = vpop.xlane.xlu0 %537
    %v539 = vmul.f32 %v529, %v217
    %v540 = vmul.f32 %v532, %v217
    %v541 = vmul.f32 %v535, %v217
    %v542 = vmul.f32 %v538, %v217
    %v543 = vsub.f32 %v487, %v539
    %v544 = vsub.f32 %v516, %v539
    %v545 = vsub.f32 %v490, %v540
    %v546 = vsub.f32 %v519, %v540
    %v547 = vsub.f32 %v493, %v541
    %v548 = vsub.f32 %v522, %v541
    %v549 = vsub.f32 %v496, %v542
    %v550 = vsub.f32 %v525, %v542
    %v551 = vmul.f32 %v543, %v543
    %v552 = vmul.f32 %v544, %v544
    %v553 = vmul.f32 %v545, %v545
    %v554 = vmul.f32 %v546, %v546
    %v555 = vmul.f32 %v547, %v547
    %v556 = vmul.f32 %v548, %v548
    %v557 = vmul.f32 %v549, %v549
    %v558 = vmul.f32 %v550, %v550
    %v559 = vadd.f32 %v551, %v552
    %560 = vadd.xlane.f32.xlu0 %v559
    %v561 = vpop.xlane.xlu0 %560
    %v562 = vadd.f32 %v553, %v554
    %563 = vadd.xlane.f32.xlu0 %v562
    %v564 = vpop.xlane.xlu0 %563
    %v565 = vadd.f32 %v555, %v556
    %566 = vadd.xlane.f32.xlu0 %v565
    %v567 = vpop.xlane.xlu0 %566
    %v568 = vadd.f32 %v557, %v558
    %569 = vadd.xlane.f32.xlu0 %v568
    %v570 = vpop.xlane.xlu0 %569
    %v571 = vmul.f32 %v561, %v217
    %v572 = vmul.f32 %v564, %v217
    %v573 = vmul.f32 %v567, %v217
    %v574 = vmul.f32 %v570, %v217
    %s575 = scalar_lea.vmem %s2, 32
    %v576 = vld [vmem:[%s575] sm:$0xff]
    %v577 = vld [vmem:[%s575 + $0x8] sm:$0xff]
    %v578 = vld [vmem:[%s575 + $0x10] sm:$0xff]
    %v579 = vld [vmem:[%s575 + $0x18] sm:$0xff]
    %v580 = vadd.f32 %v571, 1e-05
    %v581 = vadd.f32 %v572, 1e-05
    %v582 = vadd.f32 %v573, 1e-05
    %v583 = vadd.f32 %v574, 1e-05
    %v584 = vrsqrt.pop %v580
    %v585 = vmul.f32 %v584, %v580
    %v586 = vmul.f32 %v585, %v584
    %v587 = vmul.f32 0.5, %v586
    %v588 = vsub.f32 1.5, %v587
    %v589 = vmul.f32 %v584, %v588
    %vm590 = vweird.f32 %v580
    %vm591 = vweird.f32 %v584
    %vm592 = vmor %vm590, %vm591
    %v593 = vsel %vm592, %v584, %v589
    %v594 = vrsqrt.pop %v581
    %v595 = vmul.f32 %v594, %v581
    %v596 = vmul.f32 %v595, %v594
    %v597 = vmul.f32 0.5, %v596
    %v598 = vsub.f32 1.5, %v597
    %v599 = vmul.f32 %v594, %v598
    %vm600 = vweird.f32 %v581
    %vm601 = vweird.f32 %v594
    %vm602 = vmor %vm600, %vm601
    %v603 = vsel %vm602, %v594, %v599
    %v604 = vrsqrt.pop %v582
    %v605 = vmul.f32 %v604, %v582
    %v606 = vmul.f32 %v605, %v604
    %v607 = vmul.f32 0.5, %v606
    %v608 = vsub.f32 1.5, %v607
    %v609 = vmul.f32 %v604, %v608
    %vm610 = vweird.f32 %v582
    %vm611 = vweird.f32 %v604
    %vm612 = vmor %vm610, %vm611
    %v613 = vsel %vm612, %v604, %v609
    %v614 = vrsqrt.pop %v583
    %v615 = vmul.f32 %v614, %v583
    %v616 = vmul.f32 %v615, %v614
    %v617 = vmul.f32 0.5, %v616
    %v618 = vsub.f32 1.5, %v617
    %v619 = vmul.f32 %v614, %v618
    %vm620 = vweird.f32 %v583
    %vm621 = vweird.f32 %v614
    %vm622 = vmor %vm620, %vm621
    %v623 = vsel %vm622, %v614, %v619
    %v624 = vmul.f32 %v576, %v593
    %v625 = vmul.f32 %v577, %v603
    %v626 = vmul.f32 %v578, %v613
    %v627 = vmul.f32 %v579, %v623
    %629 = vset.pattern.permute.xlu0 0
    %630 = vperm.xlu0 %629, %v624
    %v631 = vpop.permute.xlu0 %630
    %634 = vset.pattern.permute.xlu0 0
    %635 = vperm.xlu0 %634, %v625
    %v636 = vpop.permute.xlu0 %635
    %639 = vset.pattern.permute.xlu0 0
    %640 = vperm.xlu0 %639, %v626
    %v641 = vpop.permute.xlu0 %640
    %644 = vset.pattern.permute.xlu0 0
    %645 = vperm.xlu0 %644, %v627
    %v646 = vpop.permute.xlu0 %645
    %v648 = vmul.f32 %v543, %v631
    %v649 = vmul.f32 %v544, %v631
    %v650 = vmul.f32 %v545, %v636
    %v651 = vmul.f32 %v546, %v636
    %v652 = vmul.f32 %v547, %v641
    %v653 = vmul.f32 %v548, %v641
    %v654 = vmul.f32 %v549, %v646
    %v655 = vmul.f32 %v550, %v646
    %s656 = scalar_lea.vmem %s3, 32
    %v657 = vld [vmem:[%s656] sm:$0xff]
    %v658 = vld [vmem:[%s656 + $0x8] sm:$0xff]
    %v659 = vld [vmem:[%s656 + $0x10] sm:$0xff]
    %v660 = vld [vmem:[%s656 + $0x18] sm:$0xff]
    %662 = vset.pattern.permute.xlu0 0
    %663 = vperm.xlu0 %662, %v657
    %v664 = vpop.permute.xlu0 %663
    %667 = vset.pattern.permute.xlu0 0
    %668 = vperm.xlu0 %667, %v658
    %v669 = vpop.permute.xlu0 %668
    %672 = vset.pattern.permute.xlu0 0
    %673 = vperm.xlu0 %672, %v659
    %v674 = vpop.permute.xlu0 %673
    %677 = vset.pattern.permute.xlu0 0
    %678 = vperm.xlu0 %677, %v660
    %v679 = vpop.permute.xlu0 %678
    %v681 = vadd.f32 %v648, %v664
    %v682 = vadd.f32 %v649, %v664
    %v683 = vadd.f32 %v650, %v669
    %v684 = vadd.f32 %v651, %v669
    %v685 = vadd.f32 %v652, %v674
    %v686 = vadd.f32 %v653, %v674
    %v687 = vadd.f32 %v654, %v679
    %v688 = vadd.f32 %v655, %v679
    %v689 = vmax.f32 %v681, 0.0
    %v690 = vmax.f32 %v682, 0.0
    %v691 = vmax.f32 %v683, 0.0
    %v692 = vmax.f32 %v684, 0.0
    %v693 = vmax.f32 %v685, 0.0
    %v694 = vmax.f32 %v686, 0.0
    %v695 = vmax.f32 %v687, 0.0
    %v696 = vmax.f32 %v688, 0.0
    %v697 = vadd.f32 %v374, %v689
    %v698 = vadd.f32 %v375, %v690
    %v699 = vadd.f32 %v376, %v691
    %v700 = vadd.f32 %v377, %v692
    %v701 = vadd.f32 %v378, %v693
    %v702 = vadd.f32 %v379, %v694
    %v703 = vadd.f32 %v380, %v695
    %v704 = vadd.f32 %v381, %v696
    %705 = vrot.lane.b32.xlu0 %v697, 9
    %v706 = vpop.permute.xlu0 %705
    %707 = vrot.lane.b32.xlu0 %v699, 9
    %v708 = vpop.permute.xlu0 %707
    %709 = vrot.lane.b32.xlu0 %v701, 9
    %v710 = vpop.permute.xlu0 %709
    %711 = vrot.lane.b32.xlu0 %v703, 9
    %v712 = vpop.permute.xlu0 %711
    %713 = vrot.lane.b32.xlu0 %v698, 9
    %v714 = vpop.permute.xlu0 %713
    %715 = vrot.lane.b32.xlu0 %v700, 9
    %v716 = vpop.permute.xlu0 %715
    %717 = vrot.lane.b32.xlu0 %v702, 9
    %v718 = vpop.permute.xlu0 %717
    %719 = vrot.lane.b32.xlu0 %v704, 9
    %v720 = vpop.permute.xlu0 %719
    %vm721 = vcmp.lt.s32.totalorder %v28, 9
    %v722 = vsel %vm721, %v706, %v714
    %v723 = vsel %vm721, %v708, %v716
    %v724 = vsel %vm721, %v710, %v718
    %v725 = vsel %vm721, %v712, %v720
    %v726 = vsel %vm721, %v714, %v706
    %v727 = vsel %vm721, %v716, %v708
    %v728 = vsel %vm721, %v718, %v710
    %v729 = vsel %vm721, %v720, %v712
    %vm730 = vcmp.ge.s32.totalorder %v52, 9
    %vm731 = vcmp.ge.s32.totalorder %v53, 9
    %v732 = vsel %vm730, %v726, 0.0
    %v733 = vsel %vm731, %v722, 0.0
    %v734 = vsel %vm730, %v727, 0.0
    %v735 = vsel %vm731, %v723, 0.0
    %v736 = vsel %vm730, %v728, 0.0
    %v737 = vsel %vm731, %v724, 0.0
    %v738 = vsel %vm730, %v729, 0.0
    %v739 = vsel %vm731, %v725, 0.0
    %740 = vrot.lane.b32.xlu0 %v697, 18
    %v741 = vpop.permute.xlu0 %740
    %742 = vrot.lane.b32.xlu0 %v699, 18
    %v743 = vpop.permute.xlu0 %742
    %744 = vrot.lane.b32.xlu0 %v701, 18
    %v745 = vpop.permute.xlu0 %744
    %746 = vrot.lane.b32.xlu0 %v703, 18
    %v747 = vpop.permute.xlu0 %746
    %748 = vrot.lane.b32.xlu0 %v698, 18
    %v749 = vpop.permute.xlu0 %748
    %750 = vrot.lane.b32.xlu0 %v700, 18
    %v751 = vpop.permute.xlu0 %750
    %752 = vrot.lane.b32.xlu0 %v702, 18
    %v753 = vpop.permute.xlu0 %752
    %754 = vrot.lane.b32.xlu0 %v704, 18
    %v755 = vpop.permute.xlu0 %754
    %vm756 = vcmp.lt.s32.totalorder %v28, 18
    %v757 = vsel %vm756, %v741, %v749
    %v758 = vsel %vm756, %v743, %v751
    %v759 = vsel %vm756, %v745, %v753
    %v760 = vsel %vm756, %v747, %v755
    %v761 = vsel %vm756, %v749, %v741
    %v762 = vsel %vm756, %v751, %v743
    %v763 = vsel %vm756, %v753, %v745
    %v764 = vsel %vm756, %v755, %v747
    %vm765 = vcmp.ge.s32.totalorder %v52, 18
    %vm766 = vcmp.ge.s32.totalorder %v53, 18
    %v767 = vsel %vm765, %v761, 0.0
    %v768 = vsel %vm766, %v757, 0.0
    %v769 = vsel %vm765, %v762, 0.0
    %v770 = vsel %vm766, %v758, 0.0
    %v771 = vsel %vm765, %v763, 0.0
    %v772 = vsel %vm766, %v759, 0.0
    %v773 = vsel %vm765, %v764, 0.0
    %v774 = vsel %vm766, %v760, 0.0
    %s775 = scalar_lea.vmem %s1, 64
    %v776 = vld [vmem:[%s775] sm:$0xff]
    %v777 = vld [vmem:[%s775 + $0x8] sm:$0xff]
    %v778 = vld [vmem:[%s775 + $0x10] sm:$0xff]
    %v779 = vld [vmem:[%s775 + $0x18] sm:$0xff]
    %v781 = vsel %vm128, %v776, 0
    %v784 = vsel %vm128, %v777, 0
    %v787 = vsel %vm128, %v778, 0
    %v790 = vsel %vm128, %v779, 0
    %792 = vmatpush.msra.mxu0 0.0
    %793 = vmatpush.msra.mxu0 0.0
    %794 = vmatpush.msra.mxu0 0.0
    %795 = vmatpush.msra.mxu0 0.0
    %796 = vmatpush.msra.mxu0 %v773
    %797 = vmatpush.msra.mxu0 %v771
    %798 = vmatpush.msra.mxu0 %v769
    %799 = vmatpush.msra.mxu0 %v767
    %800 = vmatpush.msra.mxu0 %v738
    %801 = vmatpush.msra.mxu0 %v736
    %802 = vmatpush.msra.mxu0 %v734
    %803 = vmatpush.msra.mxu0 %v732
    %804 = vmatpush.msra.mxu0 %v703
    %805 = vmatpush.msra.mxu0 %v701
    %806 = vmatpush.msra.mxu0 %v699
    %807 = vmatpush.msra.mxu0 %v697
    %808 = vmatmul.f32.gmra.mxu0 %v781
    %v809 = vpop.f32.mrf.mxu0
    %v810 = vadd.f32 0.0, %v809
    %811 = vmatmul.f32.gmra.mxu0 %v784
    %v812 = vpop.f32.mrf.mxu0
    %v813 = vadd.f32 0.0, %v812
    %814 = vmatmul.f32.gmra.mxu0 %v787
    %v815 = vpop.f32.mrf.mxu0
    %v816 = vadd.f32 0.0, %v815
    %817 = vmatmul.f32.gmra.mxu0 %v790
    %v818 = vpop.f32.mrf.mxu0
    %v819 = vadd.f32 0.0, %v818
    %820 = vdwg.mxu0
    %821 = vmatpush.msra.mxu0 0.0
    %822 = vmatpush.msra.mxu0 0.0
    %823 = vmatpush.msra.mxu0 0.0
    %824 = vmatpush.msra.mxu0 0.0
    %825 = vmatpush.msra.mxu0 %v774
    %826 = vmatpush.msra.mxu0 %v772
    %827 = vmatpush.msra.mxu0 %v770
    %828 = vmatpush.msra.mxu0 %v768
    %829 = vmatpush.msra.mxu0 %v739
    %830 = vmatpush.msra.mxu0 %v737
    %831 = vmatpush.msra.mxu0 %v735
    %832 = vmatpush.msra.mxu0 %v733
    %833 = vmatpush.msra.mxu0 %v704
    %834 = vmatpush.msra.mxu0 %v702
    %835 = vmatpush.msra.mxu0 %v700
    %836 = vmatpush.msra.mxu0 %v698
    %837 = vmatmul.f32.gmra.mxu0 %v781
    %v838 = vpop.f32.mrf.mxu0
    %v839 = vadd.f32 0.0, %v838
    %840 = vmatmul.f32.gmra.mxu0 %v784
    %v841 = vpop.f32.mrf.mxu0
    %v842 = vadd.f32 0.0, %v841
    %843 = vmatmul.f32.gmra.mxu0 %v787
    %v844 = vpop.f32.mrf.mxu0
    %v845 = vadd.f32 0.0, %v844
    %846 = vmatmul.f32.gmra.mxu0 %v790
    %v847 = vpop.f32.mrf.mxu0
    %v848 = vadd.f32 0.0, %v847
    %849 = vdwg.mxu0
    %v850 = vadd.f32 %v810, %v839
    %851 = vadd.xlane.f32.xlu0 %v850
    %v852 = vpop.xlane.xlu0 %851
    %v853 = vadd.f32 %v813, %v842
    %854 = vadd.xlane.f32.xlu0 %v853
    %v855 = vpop.xlane.xlu0 %854
    %v856 = vadd.f32 %v816, %v845
    %857 = vadd.xlane.f32.xlu0 %v856
    %v858 = vpop.xlane.xlu0 %857
    %v859 = vadd.f32 %v819, %v848
    %860 = vadd.xlane.f32.xlu0 %v859
    %v861 = vpop.xlane.xlu0 %860
    %v862 = vmul.f32 %v852, %v217
    %v863 = vmul.f32 %v855, %v217
    %v864 = vmul.f32 %v858, %v217
    %v865 = vmul.f32 %v861, %v217
    %v866 = vsub.f32 %v810, %v862
    %v867 = vsub.f32 %v839, %v862
    %v868 = vsub.f32 %v813, %v863
    %v869 = vsub.f32 %v842, %v863
    %v870 = vsub.f32 %v816, %v864
    %v871 = vsub.f32 %v845, %v864
    %v872 = vsub.f32 %v819, %v865
    %v873 = vsub.f32 %v848, %v865
    %v874 = vmul.f32 %v866, %v866
    %v875 = vmul.f32 %v867, %v867
    %v876 = vmul.f32 %v868, %v868
    %v877 = vmul.f32 %v869, %v869
    %v878 = vmul.f32 %v870, %v870
    %v879 = vmul.f32 %v871, %v871
    %v880 = vmul.f32 %v872, %v872
    %v881 = vmul.f32 %v873, %v873
    %v882 = vadd.f32 %v874, %v875
    %883 = vadd.xlane.f32.xlu0 %v882
    %v884 = vpop.xlane.xlu0 %883
    %v885 = vadd.f32 %v876, %v877
    %886 = vadd.xlane.f32.xlu0 %v885
    %v887 = vpop.xlane.xlu0 %886
    %v888 = vadd.f32 %v878, %v879
    %889 = vadd.xlane.f32.xlu0 %v888
    %v890 = vpop.xlane.xlu0 %889
    %v891 = vadd.f32 %v880, %v881
    %892 = vadd.xlane.f32.xlu0 %v891
    %v893 = vpop.xlane.xlu0 %892
    %v894 = vmul.f32 %v884, %v217
    %v895 = vmul.f32 %v887, %v217
    %v896 = vmul.f32 %v890, %v217
    %v897 = vmul.f32 %v893, %v217
    %s898 = scalar_lea.vmem %s2, 64
    %v899 = vld [vmem:[%s898] sm:$0xff]
    %v900 = vld [vmem:[%s898 + $0x8] sm:$0xff]
    %v901 = vld [vmem:[%s898 + $0x10] sm:$0xff]
    %v902 = vld [vmem:[%s898 + $0x18] sm:$0xff]
    %v903 = vadd.f32 %v894, 1e-05
    %v904 = vadd.f32 %v895, 1e-05
    %v905 = vadd.f32 %v896, 1e-05
    %v906 = vadd.f32 %v897, 1e-05
    %v907 = vrsqrt.pop %v903
    %v908 = vmul.f32 %v907, %v903
    %v909 = vmul.f32 %v908, %v907
    %v910 = vmul.f32 0.5, %v909
    %v911 = vsub.f32 1.5, %v910
    %v912 = vmul.f32 %v907, %v911
    %vm913 = vweird.f32 %v903
    %vm914 = vweird.f32 %v907
    %vm915 = vmor %vm913, %vm914
    %v916 = vsel %vm915, %v907, %v912
    %v917 = vrsqrt.pop %v904
    %v918 = vmul.f32 %v917, %v904
    %v919 = vmul.f32 %v918, %v917
    %v920 = vmul.f32 0.5, %v919
    %v921 = vsub.f32 1.5, %v920
    %v922 = vmul.f32 %v917, %v921
    %vm923 = vweird.f32 %v904
    %vm924 = vweird.f32 %v917
    %vm925 = vmor %vm923, %vm924
    %v926 = vsel %vm925, %v917, %v922
    %v927 = vrsqrt.pop %v905
    %v928 = vmul.f32 %v927, %v905
    %v929 = vmul.f32 %v928, %v927
    %v930 = vmul.f32 0.5, %v929
    %v931 = vsub.f32 1.5, %v930
    %v932 = vmul.f32 %v927, %v931
    %vm933 = vweird.f32 %v905
    %vm934 = vweird.f32 %v927
    %vm935 = vmor %vm933, %vm934
    %v936 = vsel %vm935, %v927, %v932
    %v937 = vrsqrt.pop %v906
    %v938 = vmul.f32 %v937, %v906
    %v939 = vmul.f32 %v938, %v937
    %v940 = vmul.f32 0.5, %v939
    %v941 = vsub.f32 1.5, %v940
    %v942 = vmul.f32 %v937, %v941
    %vm943 = vweird.f32 %v906
    %vm944 = vweird.f32 %v937
    %vm945 = vmor %vm943, %vm944
    %v946 = vsel %vm945, %v937, %v942
    %v947 = vmul.f32 %v899, %v916
    %v948 = vmul.f32 %v900, %v926
    %v949 = vmul.f32 %v901, %v936
    %v950 = vmul.f32 %v902, %v946
    %952 = vset.pattern.permute.xlu0 0
    %953 = vperm.xlu0 %952, %v947
    %v954 = vpop.permute.xlu0 %953
    %957 = vset.pattern.permute.xlu0 0
    %958 = vperm.xlu0 %957, %v948
    %v959 = vpop.permute.xlu0 %958
    %962 = vset.pattern.permute.xlu0 0
    %963 = vperm.xlu0 %962, %v949
    %v964 = vpop.permute.xlu0 %963
    %967 = vset.pattern.permute.xlu0 0
    %968 = vperm.xlu0 %967, %v950
    %v969 = vpop.permute.xlu0 %968
    %v971 = vmul.f32 %v866, %v954
    %v972 = vmul.f32 %v867, %v954
    %v973 = vmul.f32 %v868, %v959
    %v974 = vmul.f32 %v869, %v959
    %v975 = vmul.f32 %v870, %v964
    %v976 = vmul.f32 %v871, %v964
    %v977 = vmul.f32 %v872, %v969
    %v978 = vmul.f32 %v873, %v969
    %s979 = scalar_lea.vmem %s3, 64
    %v980 = vld [vmem:[%s979] sm:$0xff]
    %v981 = vld [vmem:[%s979 + $0x8] sm:$0xff]
    %v982 = vld [vmem:[%s979 + $0x10] sm:$0xff]
    %v983 = vld [vmem:[%s979 + $0x18] sm:$0xff]
    %985 = vset.pattern.permute.xlu0 0
    %986 = vperm.xlu0 %985, %v980
    %v987 = vpop.permute.xlu0 %986
    %990 = vset.pattern.permute.xlu0 0
    %991 = vperm.xlu0 %990, %v981
    %v992 = vpop.permute.xlu0 %991
    %995 = vset.pattern.permute.xlu0 0
    %996 = vperm.xlu0 %995, %v982
    %v997 = vpop.permute.xlu0 %996
    %1000 = vset.pattern.permute.xlu0 0
    %1001 = vperm.xlu0 %1000, %v983
    %v1002 = vpop.permute.xlu0 %1001
    %v1004 = vadd.f32 %v971, %v987
    %v1005 = vadd.f32 %v972, %v987
    %v1006 = vadd.f32 %v973, %v992
    %v1007 = vadd.f32 %v974, %v992
    %v1008 = vadd.f32 %v975, %v997
    %v1009 = vadd.f32 %v976, %v997
    %v1010 = vadd.f32 %v977, %v1002
    %v1011 = vadd.f32 %v978, %v1002
    %v1012 = vmax.f32 %v1004, 0.0
    %v1013 = vmax.f32 %v1005, 0.0
    %v1014 = vmax.f32 %v1006, 0.0
    %v1015 = vmax.f32 %v1007, 0.0
    %v1016 = vmax.f32 %v1008, 0.0
    %v1017 = vmax.f32 %v1009, 0.0
    %v1018 = vmax.f32 %v1010, 0.0
    %v1019 = vmax.f32 %v1011, 0.0
    %v1020 = vadd.f32 %v697, %v1012
    %v1021 = vadd.f32 %v698, %v1013
    %v1022 = vadd.f32 %v699, %v1014
    %v1023 = vadd.f32 %v700, %v1015
    %v1024 = vadd.f32 %v701, %v1016
    %v1025 = vadd.f32 %v702, %v1017
    %v1026 = vadd.f32 %v703, %v1018
    %v1027 = vadd.f32 %v704, %v1019
    %1028 = vst [vmem:[#allocation2] sm:$0xff] %v1020
    %1029 = vst [vmem:[#allocation2 + $0x8] sm:$0xff] %v1022
    %1030 = vst [vmem:[#allocation2 + $0x10] sm:$0xff] %v1024
    %1031 = vst [vmem:[#allocation2 + $0x18] sm:$0xff] %v1026
    %s1032 = scalar_lea.vmem [#allocation2], 32
    %1033 = vst [vmem:[%s1032] sm:$0xff] %v1021
    %1034 = vst [vmem:[%s1032 + $0x8] sm:$0xff] %v1023
    %1035 = vst [vmem:[%s1032 + $0x10] sm:$0xff] %v1025
    %1036 = vst [vmem:[%s1032 + $0x18] sm:$0xff] %v1027
    // Predicated region
    $region18: #{tpu_custom_call.1} parent=1 // pred_check
      _
    $region19: #{tpu_custom_call.1} parent=1 // pred_check_branch
      %1038 = sbr.rel (0) target = $region21
    $region20: #{tpu_custom_call.1} parent=1 // pred_region
      %1040 = vsyncadd [#allocation3], 0
      %s1041 = sshll.u32 [#allocation2], 4
      %s1042 = int_to_ptr.vmem [resolvable:$true] %s1041
      %s1043 = sshll.u32 %s4, 4
      %s1044 = int_to_ptr.hbm [resolvable:$true] %s1043
      %1049 = dma.vmem_to_hbm [thread:$0]  %s1042, 1024, %s1044, [#allocation3], 128, 128, 8
    $region21: #{tpu_custom_call.1} parent=1 // pred_fallthru
      _
    // Predicated region
    $region22: #{tpu_custom_call.1} parent=1 // pred_check
      _
    $region23: #{tpu_custom_call.1} parent=1 // pred_check_branch
      %1051 = sbr.rel (0) target = $region25
    $region24: #{tpu_custom_call.1} parent=1 // pred_region
      %1053 = dma.done [#allocation3], 1024
    $region25: #{tpu_custom_call.1} parent=1 // pred_fallthru
      _
    %1054 = vsyncpa [#allocation3], 1

</llo_original>
